<compile_context>
chip_gen: v7x
topology: tpu7x:2x2x1
jax: 0.10.0
libtpu: 0.0.40
codegen_flags: <defaults>
</compile_context>

<pallas_src>
import math

import jax
import jax.numpy as jnp
from jax.experimental import pallas as pl
from jax.experimental.pallas import tpu as pltpu

_NEG_BIG = -1e30  # bias for padded vocab columns: exp() underflows to exactly 0


def _round_up(a, b):
    return ((a + b - 1) // b) * b


def generator_kernel(x_ref, w_ref, b_ref, o_ref, acc_ref, m_ref, l_ref):
    # x_ref: (tm, d_model)  w_ref: (d_model, tn)  b_ref: (1, tn)
    # o_ref: (tm, vocab_padded)  acc_ref: (tm, vocab_padded) f32
    j = pl.program_id(1)
    nj = pl.num_programs(1)

    @pl.when(j == 0)
    def _():
        m_ref[...] = jnp.full_like(m_ref, -jnp.inf)
        l_ref[...] = jnp.zeros_like(l_ref)

    # logits tile = x @ W[:, j-tile] + b[j-tile]   (MXU, f32 accumulate)
    logits = jnp.dot(x_ref[...], w_ref[...],
                     preferred_element_type=jnp.float32) + b_ref[...]

    # Online logsumexp update (running max + rescaled running sum-exp).
    m_prev = m_ref[...]
    m_new = jnp.maximum(m_prev, jnp.max(logits, axis=-1, keepdims=True))
    alpha = jnp.exp(m_prev - m_new)                        # 0 on the first step
    l_ref[...] = alpha * l_ref[...] + jnp.sum(jnp.exp(logits - m_new),
                                              axis=-1, keepdims=True)
    m_ref[...] = m_new

    # Stage the raw f32 logits for this vocab tile in the row-panel accumulator.
    tn = logits.shape[-1]
    col = pl.multiple_of(j * tn, tn)
    acc_ref[:, pl.ds(col, tn)] = logits

    # Finalize on the last vocab step: log_softmax = logits - (m + log(sum)).
    @pl.when(j == nj - 1)
    def _():
        lse = m_ref[...] + jnp.log(l_ref[...])
        o_ref[...] = (acc_ref[...] - lse).astype(o_ref.dtype)


def generator_forward(x, weight, bias, *, tm=256, tn=2048,
                      out_dtype=None, mxu_dtype=None):
    """log_softmax(x @ weight + bias, axis=-1).

    x:      [..., d_model]
    weight: [d_model, vocab]  (transpose of torch nn.Linear.weight)
    bias:   [vocab]
    mxu_dtype: e.g. jnp.bfloat16 on v6e/v7x to run the MXU at full rate.
    out_dtype: e.g. jnp.bfloat16 on v5e to halve the (roofline-binding) writeback.
    """
    *lead, d_model = x.shape
    vocab = weight.shape[1]
    rows = int(math.prod(lead)) if lead else 1
    out_dt = jnp.dtype(out_dtype) if out_dtype is not None else x.dtype

    # Effective tiles (clamped to problem size, hardware-aligned) + padded extents.
    tm_eff = min(_round_up(tm, 8), _round_up(rows, 8))
    tn_eff = min(_round_up(tn, 128), _round_up(vocab, 128))
    rp = _round_up(rows, tm_eff)
    vp = _round_up(vocab, tn_eff)

    x2 = x.reshape(rows, d_model)
    if rp != rows:
        x2 = jnp.pad(x2, ((0, rp - rows), (0, 0)))
    w = weight
    b = bias
    if vp != vocab:
        w = jnp.pad(w, ((0, 0), (0, vp - vocab)))
        b = jnp.pad(b, (0, vp - vocab), constant_values=_NEG_BIG)
    if mxu_dtype is not None:
        x2 = x2.astype(mxu_dtype)
        w = w.astype(mxu_dtype)
    b2 = b.astype(jnp.float32).reshape(1, vp)

    grid = (rp // tm_eff, vp // tn_eff)

    # Explicit VMEM budget (re-derived per tiling; stays under v7x's 64 MiB for
    # sane tm/tn choices, never asks for more than 127 MiB).
    isz = lambda d: jnp.dtype(d).itemsize
    vmem_est = (tm_eff * vp * 4 + 2 * tm_eff * 4            # logits panel + m/l
                + 2 * tm_eff * vp * isz(out_dt)             # output block (dbl buf)
                + 2 * d_model * tn_eff * isz(w.dtype)       # weight tile (dbl buf)
                + 2 * tm_eff * d_model * isz(x2.dtype)      # x tile (dbl buf)
                + 2 * tn_eff * 4)                           # bias tile (dbl buf)
    vmem_limit = int(min(127 << 20, max(32 << 20, int(vmem_est * 1.25) + (4 << 20))))

    cost = pl.CostEstimate(
        flops=2 * rp * d_model * vp,
        transcendentals=rp * vp,
        bytes_accessed=(x2.size * isz(x2.dtype)
                        + grid[0] * w.size * isz(w.dtype)   # weight re-streamed per row tile
                        + b2.size * 4
                        + rp * vp * isz(out_dt)),
    )

    out = pl.pallas_call(
        generator_kernel,
        out_shape=jax.ShapeDtypeStruct((rp, vp), out_dt),
        grid_spec=pltpu.PrefetchScalarGridSpec(
            num_scalar_prefetch=0,
            grid=grid,
            in_specs=[
                pl.BlockSpec((tm_eff, d_model), lambda i, j: (i, 0)),   # x row tile
                pl.BlockSpec((d_model, tn_eff), lambda i, j: (0, j)),   # weight tile
                pl.BlockSpec((1, tn_eff), lambda i, j: (0, j)),         # bias tile
            ],
            out_specs=pl.BlockSpec((tm_eff, vp), lambda i, j: (i, 0)),  # row panel
            scratch_shapes=[
                pltpu.VMEM((tm_eff, vp), jnp.float32),   # raw logits panel
                pltpu.VMEM((tm_eff, 1), jnp.float32),    # running max
                pltpu.VMEM((tm_eff, 1), jnp.float32),    # running sum-exp
            ],
        ),
        compiler_params=pltpu.CompilerParams(
            dimension_semantics=("parallel", "arbitrary"),
            vmem_limit_bytes=vmem_limit,
        ),
        cost_estimate=cost,
    )(x2, w, b2)

    return out[:rows, :vocab].reshape(*lead, vocab)


def reference_forward(x, weight, bias):
    logits = jnp.einsum("...d,dv->...v", x, weight) + bias
    return jax.nn.log_softmax(logits, axis=-1)


if __name__ == "__main__":
    # --- case 1: small shapes matching the module (single vocab tile) ---
    batch, seq, d_model, vocab = 2, 8, 32, 128
    kx, kw, kb = jax.random.split(jax.random.PRNGKey(0), 3)
    bound = 1.0 / math.sqrt(d_model)
    weight = jax.random.uniform(kw, (d_model, vocab), jnp.float32, -bound, bound)
    bias = jax.random.uniform(kb, (vocab,), jnp.float32, -bound, bound)
    x = jax.random.normal(kx, (batch, seq, d_model), jnp.float32)

    out = jax.block_until_ready(generator_forward(x, weight, bias))
    ref = reference_forward(x, weight, bias)
    assert out.shape == (batch, seq, vocab)
    assert jnp.allclose(out, ref, atol=1e-5, rtol=1e-5)

    # --- case 2: exercises row padding + multi-tile online logsumexp path ---
    batch2, seq2, d_model2, vocab2 = 2, 5, 64, 384
    k2x, k2w, k2b = jax.random.split(jax.random.PRNGKey(1), 3)
    bound2 = 1.0 / math.sqrt(d_model2)
    weight2 = jax.random.uniform(k2w, (d_model2, vocab2), jnp.float32, -bound2, bound2)
    bias2 = jax.random.uniform(k2b, (vocab2,), jnp.float32, -bound2, bound2)
    xb = jax.random.normal(k2x, (batch2, seq2, d_model2), jnp.float32)

    out2 = jax.block_until_ready(generator_forward(xb, weight2, bias2, tm=8, tn=128))
    ref2 = reference_forward(xb, weight2, bias2)
    assert out2.shape == (batch2, seq2, vocab2)
    assert jnp.allclose(out2, ref2, atol=1e-5, rtol=1e-5)

    print("KERNEL_OK")
</pallas_src>

<mosaic_0001>
module attributes {stable_mosaic.version = 11 : i64} {
  func.func @generator_kernel(%arg0: i32, %arg1: i32, %arg2: memref<16x32xf32, #tpu.memory_space<vmem>>, %arg3: memref<32x128xf32, #tpu.memory_space<vmem>>, %arg4: memref<1x128xf32, #tpu.memory_space<vmem>>, %arg5: memref<16x128xf32, #tpu.memory_space<vmem>>, %arg6: memref<16x128xf32, #tpu.memory_space<vmem>>, %arg7: memref<16x1xf32, #tpu.memory_space<vmem>>, %arg8: memref<16x1xf32, #tpu.memory_space<vmem>>) attributes {dimension_semantics = [#tpu.dimension_semantics<parallel>, #tpu.dimension_semantics<arbitrary>], iteration_bounds = array<i64: 1, 1>, scalar_prefetch = 0 : i64, scratch_operands = 3 : i64, tpu.core_type = #tpu.core_type<tc>, window_params = [{transform_indices = @transform_0, window_bounds = array<i64: 16, 32>}, {transform_indices = @transform_1, window_bounds = array<i64: 32, 128>}, {transform_indices = @transform_2, window_bounds = array<i64: 1, 128>}, {transform_indices = @transform_3, window_bounds = array<i64: 16, 128>}]} {
    %c0_i32 = arith.constant 0 : i32
    %0 = arith.cmpi eq, %arg1, %c0_i32 : i32
    %1 = arith.extui %0 : i1 to i32
    %c0_i32_0 = arith.constant 0 : i32
    %2 = arith.cmpi ne, %1, %c0_i32_0 : i32
    scf.if %2 {
      %cst_19 = arith.constant 0xFF800000 : f32
      %32 = vector.broadcast %cst_19 : f32 to vector<16x1xf32>
      %c0_20 = arith.constant 0 : index
      %c0_21 = arith.constant 0 : index
      %33 = vector.load %arg7[%c0_20, %c0_21] : memref<16x1xf32, #tpu.memory_space<vmem>>, vector<16x1xf32>
      tpu.vector_store %arg7[%c0_20, %c0_21], %32 {strides = array<i32>} : memref<16x1xf32, #tpu.memory_space<vmem>>, vector<16x1xf32>,
      %cst_22 = arith.constant 0.000000e+00 : f32
      %34 = vector.broadcast %cst_22 : f32 to vector<16x1xf32>
      %c0_23 = arith.constant 0 : index
      %c0_24 = arith.constant 0 : index
      %35 = vector.load %arg8[%c0_23, %c0_24] : memref<16x1xf32, #tpu.memory_space<vmem>>, vector<16x1xf32>
      tpu.vector_store %arg8[%c0_23, %c0_24], %34 {strides = array<i32>} : memref<16x1xf32, #tpu.memory_space<vmem>>, vector<16x1xf32>,
    } else {
    }
    %c0 = arith.constant 0 : index
    %c0_1 = arith.constant 0 : index
    %3 = vector.load %arg2[%c0, %c0_1] : memref<16x32xf32, #tpu.memory_space<vmem>>, vector<16x32xf32>
    %c0_2 = arith.constant 0 : index
    %c0_3 = arith.constant 0 : index
    %4 = vector.load %arg3[%c0_2, %c0_3] : memref<32x128xf32, #tpu.memory_space<vmem>>, vector<32x128xf32>
    %cst = arith.constant dense<0.000000e+00> : vector<16x128xf32>
    %5 = tpu.matmul %3, %4, %cst {dimension_numbers = #tpu.dot_dimension_numbers<[1], [0], [0], [1], [0, 0, 1, 1], [], []>} : vector<16x32xf32>, vector<32x128xf32>, vector<16x128xf32> -> vector<16x128xf32>
    %c0_4 = arith.constant 0 : index
    %c0_5 = arith.constant 0 : index
    %6 = vector.load %arg4[%c0_4, %c0_5] : memref<1x128xf32, #tpu.memory_space<vmem>>, vector<1x128xf32>
    %7 = vector.broadcast %6 : vector<1x128xf32> to vector<16x128xf32>
    %8 = arith.addf %5, %7 : vector<16x128xf32>
    %c0_6 = arith.constant 0 : index
    %c0_7 = arith.constant 0 : index
    %9 = vector.load %arg7[%c0_6, %c0_7] : memref<16x1xf32, #tpu.memory_space<vmem>>, vector<16x1xf32>
    %cst_8 = arith.constant dense<0xFF800000> : vector<16xf32>
    %10 = vector.multi_reduction <maximumf>, %8, %cst_8 [1] : vector<16x128xf32> to vector<16xf32>
    %11 = vector.shape_cast %10 : vector<16xf32> to vector<16x1xf32>
    %12 = arith.maximumf %9, %11 : vector<16x1xf32>
    %13 = arith.subf %9, %12 : vector<16x1xf32>
    %14 = math.exp %13 : vector<16x1xf32>
    %c0_9 = arith.constant 0 : index
    %c0_10 = arith.constant 0 : index
    %15 = vector.load %arg8[%c0_9, %c0_10] : memref<16x1xf32, #tpu.memory_space<vmem>>, vector<16x1xf32>
    %16 = arith.mulf %14, %15 : vector<16x1xf32>
    %17 = vector.broadcast %12 : vector<16x1xf32> to vector<16x128xf32>
    %18 = arith.subf %8, %17 : vector<16x128xf32>
    %19 = math.exp %18 : vector<16x128xf32>
    %cst_11 = arith.constant dense<0.000000e+00> : vector<16xf32>
    %20 = vector.multi_reduction <add>, %19, %cst_11 [1] : vector<16x128xf32> to vector<16xf32>
    %21 = vector.shape_cast %20 : vector<16xf32> to vector<16x1xf32>
    %22 = arith.addf %16, %21 : vector<16x1xf32>
    %c0_12 = arith.constant 0 : index
    %c0_13 = arith.constant 0 : index
    %23 = vector.load %arg8[%c0_12, %c0_13] : memref<16x1xf32, #tpu.memory_space<vmem>>, vector<16x1xf32>
    tpu.vector_store %arg8[%c0_12, %c0_13], %22 {strides = array<i32>} : memref<16x1xf32, #tpu.memory_space<vmem>>, vector<16x1xf32>,
    %c0_14 = arith.constant 0 : index
    %c0_15 = arith.constant 0 : index
    %24 = vector.load %arg7[%c0_14, %c0_15] : memref<16x1xf32, #tpu.memory_space<vmem>>, vector<16x1xf32>
    tpu.vector_store %arg7[%c0_14, %c0_15], %12 {strides = array<i32>} : memref<16x1xf32, #tpu.memory_space<vmem>>, vector<16x1xf32>,
    %c128_i32 = arith.constant 128 : i32
    %25 = arith.muli %arg1, %c128_i32 : i32
    %26 = tpu.assume_multiple %25, 128 : i32
    %c0_16 = arith.constant 0 : index
    %27 = arith.index_cast %26 : i32 to index
    %28 = vector.load %arg6[%c0_16, %27] : memref<16x128xf32, #tpu.memory_space<vmem>>, vector<16x128xf32>
    tpu.vector_store %arg6[%c0_16, %27], %8 {strides = array<i32>} : memref<16x128xf32, #tpu.memory_space<vmem>>, vector<16x128xf32>,
    %c0_i32_17 = arith.constant 0 : i32
    %29 = arith.cmpi eq, %arg1, %c0_i32_17 : i32
    %30 = arith.extui %29 : i1 to i32
    %c0_i32_18 = arith.constant 0 : i32
    %31 = arith.cmpi ne, %30, %c0_i32_18 : i32
    scf.if %31 {
      %c0_19 = arith.constant 0 : index
      %c0_20 = arith.constant 0 : index
      %32 = vector.load %arg7[%c0_19, %c0_20] : memref<16x1xf32, #tpu.memory_space<vmem>>, vector<16x1xf32>
      %c0_21 = arith.constant 0 : index
      %c0_22 = arith.constant 0 : index
      %33 = vector.load %arg8[%c0_21, %c0_22] : memref<16x1xf32, #tpu.memory_space<vmem>>, vector<16x1xf32>
      %34 = math.log %33 : vector<16x1xf32>
      %35 = arith.addf %32, %34 : vector<16x1xf32>
      %c0_23 = arith.constant 0 : index
      %c0_24 = arith.constant 0 : index
      %36 = vector.load %arg6[%c0_23, %c0_24] : memref<16x128xf32, #tpu.memory_space<vmem>>, vector<16x128xf32>
      %37 = vector.broadcast %35 : vector<16x1xf32> to vector<16x128xf32>
      %38 = arith.subf %36, %37 : vector<16x128xf32>
      %c0_25 = arith.constant 0 : index
      %c0_26 = arith.constant 0 : index
      %39 = vector.load %arg5[%c0_25, %c0_26] : memref<16x128xf32, #tpu.memory_space<vmem>>, vector<16x128xf32>
      tpu.vector_store %arg5[%c0_25, %c0_26], %38 {strides = array<i32>} : memref<16x128xf32, #tpu.memory_space<vmem>>, vector<16x128xf32>,
    } else {
    }
    return
  }
  func.func @transform_0(%arg0: i32, %arg1: i32) -> (i32, i32) {
    %c0_i32 = arith.constant 0 : i32
    %c0_i32_0 = arith.constant 0 : i32
    return %arg0, %c0_i32 : i32, i32
  }
  func.func @transform_1(%arg0: i32, %arg1: i32) -> (i32, i32) {
    %c0_i32 = arith.constant 0 : i32
    %c0_i32_0 = arith.constant 0 : i32
    return %c0_i32, %arg1 : i32, i32
  }
  func.func @transform_2(%arg0: i32, %arg1: i32) -> (i32, i32) {
    %c0_i32 = arith.constant 0 : i32
    %c0_i32_0 = arith.constant 0 : i32
    return %c0_i32, %arg1 : i32, i32
  }
  func.func @transform_3(%arg0: i32, %arg1: i32) -> (i32, i32) {
    %c0_i32 = arith.constant 0 : i32
    %c0_i32_0 = arith.constant 0 : i32
    return %arg0, %c0_i32 : i32, i32
  }
}

</mosaic_0001>

<llo_original>
// kernel: tpu_custom_call.1
$region0: #{tpu_custom_call.1}
  #allocation0 [shape = 'u32[]', space=smem, size = 0x4, offset = 0x4, fixed_abs, tag = 'smem constant byte address 0x4 - core index']
  #allocation1 [shape = 'u32[144,128]{1,0:T(1,128)}', space=vmem, size = 0x12000, scoped, tag = 'internal scratch']
  #allocation2 [shape = 'f32[16,128]{1,0:T(8,128)}', space=vmem, size = 0x2000, scoped, tag = 'scratch operand']
  #allocation3 [shape = 'f32[16,1]{1,0:T(8,128)}', space=vmem, size = 0x2000, scoped, tag = 'scratch operand']
  #allocation4 [shape = 'f32[16,1]{1,0:T(8,128)}', space=vmem, size = 0x2000, scoped, tag = 'scratch operand']
  %s0 = inlined_call_operand.hbm [shape: f32[16,32], index: 0, kind: input, shape index: {}]
  %s1 = inlined_call_operand.hbm [shape: f32[32,128], index: 1, kind: input, shape index: {}]
  %s2 = inlined_call_operand.vmem [shape: f32[1,128], index: 2, kind: input, shape index: {}]
  %s3 = inlined_call_operand.hbm [shape: f32[16,128], index: 3, kind: output, shape index: {}]
  %s4 = sld [smem:[#allocation0]]
  $region38: #{tpu_custom_call.1} parent=0
    _
  %s6 = ssub.s32 1, %s4
  %s7 = scalar_select 0, %s6, %s4
  $region1: #{tpu_custom_call.1} parent=0
    #allocation5 [shape = 'u8[8192]{0}', space=vmem, size = 0x2000, scoped, tag = 'input window, operand 0, single buffered']
    #allocation6 [shape = 's32[1]{0}', space=sflag, size = 0x4, scoped, tag = 'scoped memory for tpu_custom_call.1']
    #allocation7 [shape = 's32[1]{0}', space=sflag, size = 0x4, scoped, tag = 'scoped memory for tpu_custom_call.1']
    #allocation8 [shape = 'u8[16384]{0}', space=vmem, size = 0x4000, scoped, tag = 'input window, operand 1, single buffered']
    #allocation9 [shape = 's32[1]{0}', space=sflag, size = 0x4, scoped, tag = 'scoped memory for tpu_custom_call.1']
    #allocation10 [shape = 'u8[8192]{0}', space=vmem, size = 0x2000, scoped, tag = 'output window, operand 0, single buffered']
    %8 = vsyncpa [#allocation6], 0
    %9 = vsyncpa [#allocation9], 0
    %10 = vsyncpa [#allocation7], 0
    // Predicated region
    $region2: #{tpu_custom_call.1} parent=1 // pred_check
      _
    $region3: #{tpu_custom_call.1} parent=1 // pred_check_branch
      %12 = sbr.rel (0) target = $region5
    $region4: #{tpu_custom_call.1} parent=1 // pred_region
      %s14 = ssub.s32 256, 256
      %15 = vsyncadd [#allocation6], %s14
      %s16 = sshll.u32 [#allocation5], 4
      %s17 = int_to_ptr.vmem [resolvable:$true] %s16
      %22 = dma.hbm_to_vmem [thread:$0]  %s0, 256, %s17, [#allocation6], 128, 128, 8
    $region5: #{tpu_custom_call.1} parent=1 // pred_fallthru
      _
    // Predicated region
    $region6: #{tpu_custom_call.1} parent=1 // pred_check
      _
    $region7: #{tpu_custom_call.1} parent=1 // pred_check_branch
      %24 = sbr.rel (0) target = $region9
    $region8: #{tpu_custom_call.1} parent=1 // pred_region
      %s26 = ssub.s32 512, 512
      %27 = vsyncadd [#allocation9], %s26
      %s28 = sshll.u32 [#allocation8], 4
      %s29 = int_to_ptr.vmem [resolvable:$true] %s28
      %34 = dma.hbm_to_vmem [thread:$0]  %s1, 512, %s29, [#allocation9], 128, 128, 8
    $region9: #{tpu_custom_call.1} parent=1 // pred_fallthru
      _
    // Predicated region
    $region10: #{tpu_custom_call.1} parent=1 // pred_check
      _
    $region11: #{tpu_custom_call.1} parent=1 // pred_check_branch
      %36 = sbr.rel (0) target = $region13
    $region12: #{tpu_custom_call.1} parent=1 // pred_region
      _
    $region13: #{tpu_custom_call.1} parent=1 // pred_fallthru
      _
    // Predicated region
    $region14: #{tpu_custom_call.1} parent=1 // pred_check
      _
    $region15: #{tpu_custom_call.1} parent=1 // pred_check_branch
      %38 = sbr.rel (0) target = $region17
    $region16: #{tpu_custom_call.1} parent=1 // pred_region
      %39 = dma.done [#allocation6], 256
    $region17: #{tpu_custom_call.1} parent=1 // pred_fallthru
      _
    // Predicated region
    $region18: #{tpu_custom_call.1} parent=1 // pred_check
      _
    $region19: #{tpu_custom_call.1} parent=1 // pred_check_branch
      %41 = sbr.rel (0) target = $region21
    $region20: #{tpu_custom_call.1} parent=1 // pred_region
      %42 = dma.done [#allocation9], 512
    $region21: #{tpu_custom_call.1} parent=1 // pred_fallthru
      _
    %p43 = scmp.eq.s32.totalorder 0, 0
    // Predicated region
    $region22: #{tpu_custom_call.1} parent=1 // pred_check
      %p44 = pneg %p43
    $region23: #{tpu_custom_call.1} parent=1 // pred_check_branch
      %46 = sbr.rel (%p44) target = $region25
    $region24: #{tpu_custom_call.1} parent=1 // pred_region
      %vm47 = vcmask 7168
      %48 = vst.msk [vmem:[#allocation3] sm:$0xff] %vm47, -inf
      %49 = vst.msk [vmem:[#allocation3 + $0x8] sm:$0xff] %vm47, -inf
      %50 = vst.msk [vmem:[#allocation4] sm:$0xff] %vm47, 0.0
      %51 = vst.msk [vmem:[#allocation4 + $0x8] sm:$0xff] %vm47, 0.0
    $region25: #{tpu_custom_call.1} parent=1 // pred_fallthru
      _
    %v52 = vld [vmem:[#allocation5] sm:$0xff]
    %v53 = vld [vmem:[#allocation5 + $0x8] sm:$0xff]
    %v54 = vld [vmem:[#allocation8] sm:$0xff]
    %v55 = vld [vmem:[#allocation8 + $0x8] sm:$0xff]
    %v56 = vld [vmem:[#allocation8 + $0x10] sm:$0xff]
    %v57 = vld [vmem:[#allocation8 + $0x18] sm:$0xff]
    %v58 = vld [vmem:[%s2] sm:$0x1]
    %v60 = vlaneseq
    %v61 = vshrl.u32 %v60, 7
    %v62 = vsub.s32 0, %v61
    %v63 = vrot.slane %v58, %v62
    %vm65 = vcmask 261120
    %v67 = vsel %vm65, %v52, 0
    %v70 = vsel %vm65, %v53, 0
    %72 = vmatprep.subr.mxu0 0.0
    %73 = vmatpush1.msra.mxu0 %v54
    %74 = vmatprep.subr.mxu0 0.0
    %75 = vmatpush1.msra.mxu0 %v55
    %76 = vmatprep.subr.mxu0 0.0
    %77 = vmatpush1.msra.mxu0 %v56
    %78 = vmatprep.subr.mxu0 0.0
    %79 = vmatpush1.msra.mxu0 %v57
    %80 = vmatprep.subr.mxu0 0.0
    %81 = vmatpush1.msra.mxu0 0.0
    %82 = vmatprep.subr.mxu0 0.0
    %83 = vmatpush1.msra.mxu0 0.0
    %84 = vmatprep.subr.mxu0 0.0
    %85 = vmatpush1.msra.mxu0 0.0
    %86 = vmatprep.subr.mxu0 0.0
    %87 = vmatpush1.msra.mxu0 0.0
    %88 = vmatprep.subr.mxu0 0.0
    %89 = vmatpush1.msra.mxu0 0.0
    %90 = vmatprep.subr.mxu0 0.0
    %91 = vmatpush1.msra.mxu0 0.0
    %92 = vmatprep.subr.mxu0 0.0
    %93 = vmatpush1.msra.mxu0 0.0
    %94 = vmatprep.subr.mxu0 0.0
    %95 = vmatpush1.msra.mxu0 0.0
    %96 = vmatprep.subr.mxu0 0.0
    %97 = vmatpush1.msra.mxu0 0.0
    %98 = vmatprep.subr.mxu0 0.0
    %99 = vmatpush1.msra.mxu0 0.0
    %100 = vmatprep.subr.mxu0 0.0
    %101 = vmatpush1.msra.mxu0 0.0
    %102 = vmatprep.subr.mxu0 0.0
    %103 = vmatpush1.msra.mxu0 0.0
    %104 = vmatprep.subr.mxu0 0.0
    %105 = vmatpush1.msra.mxu0 0.0
    %106 = vmatprep.subr.mxu0 0.0
    %107 = vmatpush1.msra.mxu0 0.0
    %108 = vmatprep.subr.mxu0 0.0
    %109 = vmatpush1.msra.mxu0 0.0
    %110 = vmatprep.subr.mxu0 0.0
    %111 = vmatpush1.msra.mxu0 0.0
    %112 = vmatprep.subr.mxu0 0.0
    %113 = vmatpush1.msra.mxu0 0.0
    %114 = vmatprep.subr.mxu0 0.0
    %115 = vmatpush1.msra.mxu0 0.0
    %116 = vmatprep.subr.mxu0 0.0
    %117 = vmatpush1.msra.mxu0 0.0
    %118 = vmatprep.subr.mxu0 0.0
    %119 = vmatpush1.msra.mxu0 0.0
    %120 = vmatprep.subr.mxu0 0.0
    %121 = vmatpush1.msra.mxu0 0.0
    %122 = vmatprep.subr.mxu0 0.0
    %123 = vmatpush1.msra.mxu0 0.0
    %124 = vmatprep.subr.mxu0 0.0
    %125 = vmatpush1.msra.mxu0 0.0
    %126 = vmatprep.subr.mxu0 0.0
    %127 = vmatpush1.msra.mxu0 0.0
    %128 = vmatprep.subr.mxu0 0.0
    %129 = vmatpush1.msra.mxu0 0.0
    %130 = vmatprep.subr.mxu0 0.0
    %131 = vmatpush1.msra.mxu0 0.0
    %132 = vmatprep.subr.mxu0 0.0
    %133 = vmatpush1.msra.mxu0 0.0
    %134 = vmatprep.subr.mxu0 0.0
    %135 = vmatpush1.msra.mxu0 0.0
    %136 = vmatprep.mubr.f32.mxu0 0.0
    %137 = vmatmul.mubr.f32.gmra.mrb[0].mxu0 %v67
    %v138 = vpop.f32.mrb[0].mxu0
    %v139 = vadd.f32 %v63, %v138
    %v140 = vpop.f32.mrb[0].mxu0
    %141 = vmatprep.mubr.f32.mxu0 0.0
    %142 = vmatmul.mubr.f32.gmra.mrb[0].mxu0 %v70
    %v143 = vpop.f32.mrb[0].mxu0
    %v144 = vadd.f32 %v63, %v143
    %v145 = vpop.f32.mrb[0].mxu0
    %146 = vdwg.mxu0
    %v147 = vld [vmem:[#allocation3] sm:$0xff]
    %v148 = vld [vmem:[#allocation3 + $0x8] sm:$0xff]
    %149 = vmax.xlane.f32.xlu0 %v139
    %v150 = vpop.xlane.xlu0 %149
    %151 = vmax.xlane.f32.xlu0 %v144
    %v152 = vpop.xlane.xlu0 %151
    %v153 = vmax.f32 %v147, %v150
    %v154 = vmax.f32 %v148, %v152
    %v155 = vsub.f32 %v147, %v153
    %v156 = vsub.f32 %v148, %v154
    %v157 = vmul.f32 %v155, 1.442695
    %v158 = vpow.pop %v157
    %v159 = vmul.f32 %v156, 1.442695
    %v160 = vpow.pop %v159
    %v161 = vld [vmem:[#allocation4] sm:$0xff]
    %v162 = vld [vmem:[#allocation4 + $0x8] sm:$0xff]
    %v163 = vmul.f32 %v158, %v161
    %v164 = vmul.f32 %v160, %v162
    %166 = vset.pattern.permute.xlu0 0
    %167 = vperm.xlu0 %166, %v153
    %v168 = vpop.permute.xlu0 %167
    %171 = vset.pattern.permute.xlu0 0
    %172 = vperm.xlu0 %171, %v154
    %v173 = vpop.permute.xlu0 %172
    %v175 = vsub.f32 %v139, %v168
    %v176 = vsub.f32 %v144, %v173
    %v177 = vmul.f32 %v175, 1.442695
    %v178 = vpow.pop %v177
    %v179 = vmul.f32 %v176, 1.442695
    %v180 = vpow.pop %v179
    %181 = vadd.xlane.f32.xlu0 %v178
    %v182 = vpop.xlane.xlu0 %181
    %183 = vadd.xlane.f32.xlu0 %v180
    %v184 = vpop.xlane.xlu0 %183
    %v185 = vadd.f32 %v163, %v182
    %v186 = vadd.f32 %v164, %v184
    %vm187 = vcmask 7168
    %188 = vst.msk [vmem:[#allocation4] sm:$0xff] %vm187, %v185
    %189 = vst.msk [vmem:[#allocation4 + $0x8] sm:$0xff] %vm187, %v186
    %190 = vst.msk [vmem:[#allocation3] sm:$0xff] %vm187, %v153
    %191 = vst.msk [vmem:[#allocation3 + $0x8] sm:$0xff] %vm187, %v154
    %s192 = smul.u32 0, 128
    %s193 = sshra.s32 %s192, 7
    %s194 = sand.u32 %s192, 127
    %s195 = scalar_lea.vmem [#allocation2], %s193
    %196 = vst [vmem:[%s195] sm:$0xff] %v139
    %197 = vst [vmem:[%s195 + $0x8] sm:$0xff] %v144
    // Predicated region
    $region26: #{tpu_custom_call.1} parent=1 // pred_check
      %p198 = pneg %p43
    $region27: #{tpu_custom_call.1} parent=1 // pred_check_branch
      %200 = sbr.rel (%p198) target = $region29
    $region28: #{tpu_custom_call.1} parent=1 // pred_region
      %v201 = vld [vmem:[#allocation3] sm:$0xff]
      %v202 = vld [vmem:[#allocation3 + $0x8] sm:$0xff]
      %v203 = vld [vmem:[#allocation4] sm:$0xff]
      %v204 = vld [vmem:[#allocation4 + $0x8] sm:$0xff]
      %v205 = vlog2.pop %v203
      %v206 = vmul.f32 %v205, 0.6931472
      %v207 = vlog2.pop %v204
      %v208 = vmul.f32 %v207, 0.6931472
      %v209 = vadd.f32 %v201, %v206
      %v210 = vadd.f32 %v202, %v208
      %v211 = vld [vmem:[#allocation2] sm:$0xff]
      %v212 = vld [vmem:[#allocation2 + $0x8] sm:$0xff]
      %214 = vset.pattern.permute.xlu0 0
      %215 = vperm.xlu0 %214, %v209
      %v216 = vpop.permute.xlu0 %215
      %219 = vset.pattern.permute.xlu0 0
      %220 = vperm.xlu0 %219, %v210
      %v221 = vpop.permute.xlu0 %220
      %v223 = vsub.f32 %v211, %v216
      %v224 = vsub.f32 %v212, %v221
      %225 = vst [vmem:[#allocation10] sm:$0xff] %v223
      %226 = vst [vmem:[#allocation10 + $0x8] sm:$0xff] %v224
    $region29: #{tpu_custom_call.1} parent=1 // pred_fallthru
      _
    // Predicated region
    $region30: #{tpu_custom_call.1} parent=1 // pred_check
      _
    $region31: #{tpu_custom_call.1} parent=1 // pred_check_branch
      %228 = sbr.rel (0) target = $region33
    $region32: #{tpu_custom_call.1} parent=1 // pred_region
      %s230 = ssub.s32 256, 256
      %231 = vsyncadd [#allocation7], %s230
      %s232 = sshll.u32 [#allocation10], 4
      %s233 = int_to_ptr.vmem [resolvable:$true] %s232
      %238 = dma.vmem_to_hbm [thread:$0]  %s233, 256, %s3, [#allocation7], 128, 128, 8
    $region33: #{tpu_custom_call.1} parent=1 // pred_fallthru
      _
    // Predicated region
    $region34: #{tpu_custom_call.1} parent=1 // pred_check
      _
    $region35: #{tpu_custom_call.1} parent=1 // pred_check_branch
      %240 = sbr.rel (0) target = $region37
    $region36: #{tpu_custom_call.1} parent=1 // pred_region
      %241 = dma.done [#allocation7], 256
    $region37: #{tpu_custom_call.1} parent=1 // pred_fallthru
      _
    %242 = vsyncpa [#allocation6], 1
    %243 = vsyncpa [#allocation9], 1
    %244 = vsyncpa [#allocation7], 1

</llo_original>
